<compile_context>
chip_gen: v6e
topology: v6e:2x2x1
jax: 0.10.0
libtpu: 0.0.40
codegen_flags: <defaults>
</compile_context>

<pallas_src>
import functools

import jax
import jax.numpy as jnp
import numpy as np
from jax.experimental import pallas as pl
from jax.experimental.pallas import tpu as pltpu

_LANE = 128            # lane width of a vreg (last-dim tiling unit)
_MIN_SPLIT_BATCH = 1024  # only force a 2-way grid split above this batch size


def _round_up(x, m):
    return ((x + m - 1) // m) * m


def _has_multiple_tensorcores():
    """True on chips where grid 'parallel' axes can shard across TensorCores."""
    try:
        kind = jax.devices()[0].device_kind.lower()
    except Exception:
        return False
    single_core = ("v2", "v3", "v5e", "v5 lite", "v5litepod", "v6e", "v6 lite", "v6lite")
    return not any(tag in kind for tag in single_core)


def _mlp_policy_kernel(x_ref, w1_ref, b1_ref, w2_ref, b2_ref, w3_ref, b3_ref,
                       o_ref, *, act_limit):
    """Fused 3-layer MLP in feature-major layout.

    x_ref:  (obs_dim, tile)       -- batch on lanes
    wN_ref: (out_dim, in_dim)     -- torch-native weight layout
    bN_ref: (out_dim, 1), float32
    o_ref:  (act_dim, tile)       -- lane-dense output
    """
    x = x_ref[...]
    h = jnp.dot(w1_ref[...], x, preferred_element_type=jnp.float32) + b1_ref[...]
    h = jnp.maximum(h, 0.0)                                            # ReLU (f32)
    h = jnp.dot(w2_ref[...], h.astype(w2_ref.dtype),
                preferred_element_type=jnp.float32) + b2_ref[...]
    h = jnp.maximum(h, 0.0)                                            # ReLU (f32)
    h = jnp.dot(w3_ref[...], h.astype(w3_ref.dtype),
                preferred_element_type=jnp.float32) + b3_ref[...]
    o_ref[...] = (jnp.tanh(h) * act_limit).astype(o_ref.dtype)         # tanh * act_limit


def mlp_deterministic_policy_forward(state, params, act_limit, *,
                                     batch_tile=8192,
                                     compute_dtype=jnp.bfloat16,
                                     min_pallas_batch=64):
    """state: (B, obs_dim).  params: torch-layout weights (out,in) and biases (out,).

    Returns (B, act_dim) actions = tanh(mlp(state)) * act_limit.
    """
    B, obs_dim = state.shape
    out_dtype = state.dtype

    # Tiny batches (single-step RL action selection): fused XLA path beats the fixed
    # pallas_call + DMA setup cost for an ~11 kFLOP/row MLP.
    if B < min_pallas_batch:
        return reference_forward(state, params, act_limit).astype(out_dtype)

    w1, b1 = params["w1"], params["b1"]      # (h1, obs), (h1,)
    w2, b2 = params["w2"], params["b2"]      # (h2, h1),  (h2,)
    w3, b3 = params["w3"], params["b3"]      # (act, h2), (act,)
    h1, h2, act_dim = w1.shape[0], w2.shape[0], w3.shape[0]

    # act_limit: bake it into the kernel when concrete; otherwise scale outside.
    try:
        act_limit_f = float(act_limit)
        post_scale = None
    except Exception:                         # traced / abstract act_limit
        act_limit_f = 1.0
        post_scale = act_limit

    # --- compute dtype (bf16 default: MXU-native on v5e/v6e/v7x, half the DMA bytes) ---
    cd = compute_dtype if compute_dtype is not None else state.dtype
    x_t = state.astype(cd).T                  # (obs_dim, B): batch on lanes
    w1c, w2c, w3c = w1.astype(cd), w2.astype(cd), w3.astype(cd)
    # biases stay f32: they are added to the f32 MXU accumulator.
    b1c = b1.reshape(h1, 1).astype(jnp.float32)
    b2c = b2.reshape(h2, 1).astype(jnp.float32)
    b3c = b3.reshape(act_dim, 1).astype(jnp.float32)

    # --- batch tile (lane axis): biggest tile that fits, lane-aligned ---
    tile = max(_LANE, min(int(batch_tile), _round_up(B, _LANE)))
    tile = _round_up(tile, _LANE)
    # Force >=2 grid steps only where it buys TC parallelism (v4/v5p/v7x) and the
    # batch is big enough that the extra step boundary is not pure overhead.
    if (_has_multiple_tensorcores() and B >= _MIN_SPLIT_BATCH
            and _round_up(B, tile) // tile < 2):
        tile = max(_LANE, _round_up(-(-B // 2), _LANE))
    Bp = _round_up(B, tile)
    if Bp != B:
        x_t = jnp.pad(x_t, ((0, 0), (0, Bp - B)))
    grid = (Bp // tile,)

    kernel = functools.partial(_mlp_policy_kernel, act_limit=act_limit_f)

    # state tiled along the batch (lanes); parameters broadcast with constant
    # index_maps (same block every step -> their DMAs are not re-issued).
    in_specs = [
        pl.BlockSpec((obs_dim, tile), lambda i: (0, i)),
        pl.BlockSpec((h1, obs_dim), lambda i: (0, 0)),
        pl.BlockSpec((h1, 1), lambda i: (0, 0)),
        pl.BlockSpec((h2, h1), lambda i: (0, 0)),
        pl.BlockSpec((h2, 1), lambda i: (0, 0)),
        pl.BlockSpec((act_dim, h2), lambda i: (0, 0)),
        pl.BlockSpec((act_dim, 1), lambda i: (0, 0)),
    ]
    out_specs = pl.BlockSpec((act_dim, tile), lambda i: (0, i))

    out_t = pl.pallas_call(
        kernel,
        out_shape=jax.ShapeDtypeStruct((act_dim, Bp), out_dtype),
        grid_spec=pltpu.PrefetchScalarGridSpec(
            num_scalar_prefetch=0,
            grid=grid,
            in_specs=in_specs,
            out_specs=out_specs,
        ),
        compiler_params=pltpu.CompilerParams(
            dimension_semantics=("parallel",),
            vmem_limit_bytes=32 * 1024 * 1024,   # fits v7x (64 MiB phys) and v5e/v6e
        ),
    )(x_t, w1c, b1c, w2c, b2c, w3c, b3c)

    out = out_t[:, :B].T                       # (B, act_dim)
    if post_scale is not None:
        out = out * post_scale
    return out.astype(out_dtype)


def init_policy_params(key, obs_dim, hidden_sizes, act_dim):
    """Orthogonal init (gain=sqrt(2)), zero biases — torch-native (out, in) layout."""
    sizes = [obs_dim] + list(hidden_sizes) + [act_dim]
    ortho = jax.nn.initializers.orthogonal(scale=np.sqrt(2.0))
    params = {}
    keys = jax.random.split(key, len(sizes) - 1)
    for j, (fan_in, fan_out) in enumerate(zip(sizes[:-1], sizes[1:]), start=1):
        params[f"w{j}"] = ortho(keys[j - 1], (fan_out, fan_in), jnp.float32)
        params[f"b{j}"] = jnp.zeros((fan_out,), jnp.float32)
    return params


def reference_forward(state, params, act_limit):
    h = jnp.maximum(state @ params["w1"].T + params["b1"], 0.0)
    h = jnp.maximum(h @ params["w2"].T + params["b2"], 0.0)
    h = h @ params["w3"].T + params["b3"]
    return jnp.tanh(h) * act_limit


if __name__ == "__main__":
    # Small shapes consistent with the module: obs_dim=16, hidden=(32, 32), act_dim=8.
    obs_dim, act_dim = 16, 8
    hidden_sizes = (32, 32)
    act_limit = 2.0

    root = jax.random.PRNGKey(0)
    k_params, k_obs = jax.random.split(root)
    params = init_policy_params(k_params, obs_dim, hidden_sizes, act_dim)

    # Case 1: f32 compute, batch_tile=128 -> 2 grid steps (exercises the pipelined
    # batch-tiled kernel path). Exact parity with the f32 reference.
    state256 = jax.random.normal(k_obs, (256, obs_dim), jnp.float32)
    out256 = jax.block_until_ready(
        mlp_deterministic_policy_forward(state256, params, act_limit,
                                         batch_tile=128,
                                         compute_dtype=jnp.float32))
    ref256 = jax.block_until_ready(reference_forward(state256, params, act_limit))
    np.testing.assert_allclose(np.asarray(out256), np.asarray(ref256),
                               rtol=1e-5, atol=1e-5)
    assert out256.shape == (256, act_dim)

    # Case 2: ragged small batch forced through the kernel (min_pallas_batch=0)
    # -> exercises lane padding of the batch axis + slicing, still exact f32 parity.
    state19 = jax.random.normal(jax.random.fold_in(k_obs, 1), (19, obs_dim), jnp.float32)
    out19 = jax.block_until_ready(
        mlp_deterministic_policy_forward(state19, params, act_limit,
                                         compute_dtype=jnp.float32,
                                         min_pallas_batch=0))
    ref19 = jax.block_until_ready(reference_forward(state19, params, act_limit))
    np.testing.assert_allclose(np.asarray(out19), np.asarray(ref19),
                               rtol=1e-5, atol=1e-5)
    assert out19.shape == (19, act_dim)

    # Case 3: default bf16 compute path (f32 accumulation) — loose tolerance vs f32 ref.
    out_bf16 = jax.block_until_ready(
        mlp_deterministic_policy_forward(state256, params, act_limit))
    np.testing.assert_allclose(np.asarray(out_bf16), np.asarray(ref256),
                               rtol=1e-1, atol=1e-1)
    assert out_bf16.shape == (256, act_dim)

    # Case 4: tiny batch takes the XLA fallback path (no pallas_call fixed cost).
    out_small = jax.block_until_ready(
        mlp_deterministic_policy_forward(state19, params, act_limit))
    np.testing.assert_allclose(np.asarray(out_small), np.asarray(ref19),
                               rtol=1e-5, atol=1e-5)

    # TODO(synk): get_action's host-side numpy Gaussian noise / np.clip stays outside
    # the kernel (not a device op in the original module either).
    print("KERNEL_OK")
</pallas_src>

<mosaic_0001>
module attributes {stable_mosaic.version = 11 : i64} {
  func.func @_mlp_policy_kernel(%arg0: i32, %arg1: memref<16x128xf32, #tpu.memory_space<vmem>>, %arg2: memref<32x16xf32, #tpu.memory_space<vmem>>, %arg3: memref<32x1xf32, #tpu.memory_space<vmem>>, %arg4: memref<32x32xf32, #tpu.memory_space<vmem>>, %arg5: memref<32x1xf32, #tpu.memory_space<vmem>>, %arg6: memref<8x32xf32, #tpu.memory_space<vmem>>, %arg7: memref<8x1xf32, #tpu.memory_space<vmem>>, %arg8: memref<8x128xf32, #tpu.memory_space<vmem>>) attributes {dimension_semantics = [#tpu.dimension_semantics<parallel>], iteration_bounds = array<i64: 2>, scalar_prefetch = 0 : i64, scratch_operands = 0 : i64, tpu.core_type = #tpu.core_type<tc>, window_params = [{transform_indices = @transform_0, window_bounds = array<i64: 16, 128>}, {pipeline_mode = #tpu.pipeline_mode<synchronous>, transform_indices = @transform_1, window_bounds = array<i64: 32, 16>}, {pipeline_mode = #tpu.pipeline_mode<synchronous>, transform_indices = @transform_2, window_bounds = array<i64: 32, 1>}, {pipeline_mode = #tpu.pipeline_mode<synchronous>, transform_indices = @transform_3, window_bounds = array<i64: 32, 32>}, {pipeline_mode = #tpu.pipeline_mode<synchronous>, transform_indices = @transform_4, window_bounds = array<i64: 32, 1>}, {pipeline_mode = #tpu.pipeline_mode<synchronous>, transform_indices = @transform_5, window_bounds = array<i64: 8, 32>}, {pipeline_mode = #tpu.pipeline_mode<synchronous>, transform_indices = @transform_6, window_bounds = array<i64: 8, 1>}, {transform_indices = @transform_7, window_bounds = array<i64: 8, 128>}]} {
    %c0 = arith.constant 0 : index
    %c0_0 = arith.constant 0 : index
    %0 = vector.load %arg1[%c0, %c0_0] : memref<16x128xf32, #tpu.memory_space<vmem>>, vector<16x128xf32>
    %c0_1 = arith.constant 0 : index
    %c0_2 = arith.constant 0 : index
    %1 = vector.load %arg2[%c0_1, %c0_2] : memref<32x16xf32, #tpu.memory_space<vmem>>, vector<32x16xf32>
    %cst = arith.constant dense<0.000000e+00> : vector<32x128xf32>
    %2 = tpu.matmul %1, %0, %cst {dimension_numbers = #tpu.dot_dimension_numbers<[1], [0], [0], [1], [0, 0, 1, 1], [], []>} : vector<32x16xf32>, vector<16x128xf32>, vector<32x128xf32> -> vector<32x128xf32>
    %c0_3 = arith.constant 0 : index
    %c0_4 = arith.constant 0 : index
    %3 = vector.load %arg3[%c0_3, %c0_4] : memref<32x1xf32, #tpu.memory_space<vmem>>, vector<32x1xf32>
    %4 = vector.broadcast %3 : vector<32x1xf32> to vector<32x128xf32>
    %5 = arith.addf %2, %4 : vector<32x128xf32>
    %cst_5 = arith.constant 0.000000e+00 : f32
    %6 = vector.broadcast %cst_5 : f32 to vector<32x128xf32>
    %7 = arith.maximumf %5, %6 : vector<32x128xf32>
    %c0_6 = arith.constant 0 : index
    %c0_7 = arith.constant 0 : index
    %8 = vector.load %arg4[%c0_6, %c0_7] : memref<32x32xf32, #tpu.memory_space<vmem>>, vector<32x32xf32>
    %cst_8 = arith.constant dense<0.000000e+00> : vector<32x128xf32>
    %9 = tpu.matmul %8, %7, %cst_8 {dimension_numbers = #tpu.dot_dimension_numbers<[1], [0], [0], [1], [0, 0, 1, 1], [], []>} : vector<32x32xf32>, vector<32x128xf32>, vector<32x128xf32> -> vector<32x128xf32>
    %c0_9 = arith.constant 0 : index
    %c0_10 = arith.constant 0 : index
    %10 = vector.load %arg5[%c0_9, %c0_10] : memref<32x1xf32, #tpu.memory_space<vmem>>, vector<32x1xf32>
    %11 = vector.broadcast %10 : vector<32x1xf32> to vector<32x128xf32>
    %12 = arith.addf %9, %11 : vector<32x128xf32>
    %cst_11 = arith.constant 0.000000e+00 : f32
    %13 = vector.broadcast %cst_11 : f32 to vector<32x128xf32>
    %14 = arith.maximumf %12, %13 : vector<32x128xf32>
    %c0_12 = arith.constant 0 : index
    %c0_13 = arith.constant 0 : index
    %15 = vector.load %arg6[%c0_12, %c0_13] : memref<8x32xf32, #tpu.memory_space<vmem>>, vector<8x32xf32>
    %cst_14 = arith.constant dense<0.000000e+00> : vector<8x128xf32>
    %16 = tpu.matmul %15, %14, %cst_14 {dimension_numbers = #tpu.dot_dimension_numbers<[1], [0], [0], [1], [0, 0, 1, 1], [], []>} : vector<8x32xf32>, vector<32x128xf32>, vector<8x128xf32> -> vector<8x128xf32>
    %c0_15 = arith.constant 0 : index
    %c0_16 = arith.constant 0 : index
    %17 = vector.load %arg7[%c0_15, %c0_16] : memref<8x1xf32, #tpu.memory_space<vmem>>, vector<8x1xf32>
    %18 = vector.broadcast %17 : vector<8x1xf32> to vector<8x128xf32>
    %19 = arith.addf %16, %18 : vector<8x128xf32>
    %20 = math.tanh %19 : vector<8x128xf32>
    %cst_17 = arith.constant 2.000000e+00 : f32
    %21 = vector.broadcast %cst_17 : f32 to vector<8x128xf32>
    %22 = arith.mulf %20, %21 : vector<8x128xf32>
    %c0_18 = arith.constant 0 : index
    %c0_19 = arith.constant 0 : index
    %23 = vector.load %arg8[%c0_18, %c0_19] : memref<8x128xf32, #tpu.memory_space<vmem>>, vector<8x128xf32>
    tpu.vector_store %arg8[%c0_18, %c0_19], %22 {strides = array<i32>} : memref<8x128xf32, #tpu.memory_space<vmem>>, vector<8x128xf32>,
    return
  }
  func.func @transform_0(%arg0: i32) -> (i32, i32) {
    %c0_i32 = arith.constant 0 : i32
    %c0_i32_0 = arith.constant 0 : i32
    return %c0_i32, %arg0 : i32, i32
  }
  func.func @transform_1(%arg0: i32) -> (i32, i32) {
    %c0_i32 = arith.constant 0 : i32
    %c0_i32_0 = arith.constant 0 : i32
    %c0_i32_1 = arith.constant 0 : i32
    return %c0_i32, %c0_i32_0 : i32, i32
  }
  func.func @transform_2(%arg0: i32) -> (i32, i32) {
    %c0_i32 = arith.constant 0 : i32
    %c0_i32_0 = arith.constant 0 : i32
    %c0_i32_1 = arith.constant 0 : i32
    return %c0_i32, %c0_i32_0 : i32, i32
  }
  func.func @transform_3(%arg0: i32) -> (i32, i32) {
    %c0_i32 = arith.constant 0 : i32
    %c0_i32_0 = arith.constant 0 : i32
    %c0_i32_1 = arith.constant 0 : i32
    return %c0_i32, %c0_i32_0 : i32, i32
  }
  func.func @transform_4(%arg0: i32) -> (i32, i32) {
    %c0_i32 = arith.constant 0 : i32
    %c0_i32_0 = arith.constant 0 : i32
    %c0_i32_1 = arith.constant 0 : i32
    return %c0_i32, %c0_i32_0 : i32, i32
  }
  func.func @transform_5(%arg0: i32) -> (i32, i32) {
    %c0_i32 = arith.constant 0 : i32
    %c0_i32_0 = arith.constant 0 : i32
    %c0_i32_1 = arith.constant 0 : i32
    return %c0_i32, %c0_i32_0 : i32, i32
  }
  func.func @transform_6(%arg0: i32) -> (i32, i32) {
    %c0_i32 = arith.constant 0 : i32
    %c0_i32_0 = arith.constant 0 : i32
    %c0_i32_1 = arith.constant 0 : i32
    return %c0_i32, %c0_i32_0 : i32, i32
  }
  func.func @transform_7(%arg0: i32) -> (i32, i32) {
    %c0_i32 = arith.constant 0 : i32
    %c0_i32_0 = arith.constant 0 : i32
    return %c0_i32, %arg0 : i32, i32
  }
}

</mosaic_0001>

<llo_original>
// kernel: tpu_custom_call.1
$region0: #{tpu_custom_call.1}
  #allocation0 [shape = 'u32[]', space=smem, size = 0x4, offset = 0x4, fixed_abs, tag = 'smem constant byte address 0x4 - core index']
  #allocation1 [shape = 'u32[144,128]{1,0:T(1,128)}', space=vmem, size = 0x12000, scoped, tag = 'internal scratch']
  %s0 = inlined_call_operand.vmem [shape: f32[16,256], index: 0, kind: input, shape index: {}]
  %s1 = inlined_call_operand.vmem [shape: f32[32,16], index: 1, kind: input, shape index: {}]
  %s2 = inlined_call_operand.vmem [shape: f32[32,1], index: 2, kind: input, shape index: {}]
  %s3 = inlined_call_operand.vmem [shape: f32[32,32], index: 3, kind: input, shape index: {}]
  %s4 = inlined_call_operand.vmem [shape: f32[32,1], index: 4, kind: input, shape index: {}]
  %s5 = inlined_call_operand.vmem [shape: f32[8,32], index: 5, kind: input, shape index: {}]
  %s6 = inlined_call_operand.vmem [shape: f32[8,1], index: 6, kind: input, shape index: {}]
  %s7 = inlined_call_operand.hbm [shape: f32[8,256], index: 7, kind: output, shape index: {}]
  %s8 = sld [smem:[#allocation0]]
  $region99: #{tpu_custom_call.1} parent=0
    _
  %s10 = ssub.s32 1, %s8
  %s11 = scalar_select 0, %s10, %s8
  $region1: #{tpu_custom_call.1} parent=0
    #allocation2 [shape = 'u8[16384]{0}', space=vmem, size = 0x4000, scoped, tag = 'input window, operand 0']
    #allocation3 [shape = 'u8[8192]{0}', space=vmem, size = 0x2000, scoped, tag = 'output window, operand 0']
    #allocation4 [shape = 's32[2]{0}', space=sflag, size = 0x8, scoped, tag = 'scoped memory for tpu_custom_call.1']
    %12 = vsyncpa [#allocation4], 0
    %s13 = scalar_lea.sflag [#allocation4], 1
    %14 = vsyncpa %s13, 0
    loop: start=0, step=1, limit=4
    $region2: #{tpu_custom_call.1} parent=1 // loop_pre_header
      _
    $region3: #{tpu_custom_call.1} parent=1 // loop_header
      %s16 = sphi 0, %s20
      %p17 = scmp.ge.s32.totalorder %s16, 4
      %s26 = sphi 0, %s28
      %s29 = sphi 0, %s26
      %s30 = sphi 0, %s29
      %s46 = sphi 0, %s30
      %s50 = sphi 0, %s50
      %s52 = sphi 0, %s50
      %s53 = sphi 0, %s52
      %s67 = sphi 0, %s53
      %s71 = sphi 0, %s71
      %s73 = sphi 0, %s71
      %s74 = sphi 0, %s73
      %s88 = sphi 0, %s74
      %s92 = sphi 0, %s92
      %s94 = sphi 0, %s92
      %s95 = sphi 0, %s94
      %s109 = sphi 0, %s95
      %s113 = sphi 0, %s113
      %s115 = sphi 0, %s113
      %s116 = sphi 0, %s115
      %s130 = sphi 0, %s116
      %s134 = sphi 0, %s134
      %s136 = sphi 0, %s134
      %s137 = sphi 0, %s136
      %s151 = sphi 0, %s137
      %s155 = sphi 0, %s155
      %s157 = sphi 0, %s155
      %s158 = sphi 0, %s157
      %s172 = sphi 0, %s158
      %s178 = sphi 0, %s180
      %s181 = sphi 0, %s178
      %s182 = sphi 0, %s181
      %s198 = sphi 0, %s182
    $region4: #{tpu_custom_call.1} parent=1 // loop_header_branch
      %19 = sbr.rel (%p17) target = $region8
    $region5: #{tpu_custom_call.1} parent=1 // loop_body
      %s21 = ssub.s32 %s16, 1
      %s22 = ssub.s32 %s16, 2
      %s23 = sadd.s32 %s16, 1
      %s24 = ssub.s32 %s16, %s23
      %p25 = scmp.eq.s32.totalorder %s24, 0
      %s27 = sadd.s32 %s26, 1
      %s28 = scalar_select %p25, %s26, %s27
      %p31 = pneg %p25
      %p32 = scmp.eq.s32.totalorder %s16, 1
      %p33 = por %p31, %p32
      %p34 = scmp.ne.s32.totalorder %s26, %s29
      %p35 = scmp.eq.s32.totalorder %s16, 0
      %p36 = por %p34, %p35
      %p37 = scmp.ne.s32.totalorder %s26, %s29
      %p38 = scmp.eq.s32.totalorder %s21, 1
      %p39 = por %p37, %p38
      %p40 = scmp.ne.s32.totalorder %s29, %s30
      %p41 = scmp.eq.s32.totalorder %s21, 0
      %p42 = por %p40, %p41
      %p43 = scmp.ne.s32.totalorder %s29, %s30
      %p44 = scmp.eq.s32.totalorder %s22, 1
      %p45 = por %p43, %p44
      %p47 = scmp.ne.s32.totalorder %s30, %s46
      %p48 = scmp.eq.s32.totalorder %s22, 0
      %p49 = por %p47, %p48
      %s51 = sadd.s32 %s50, 1
      %p54 = scmp.eq.s32.totalorder %s16, 1
      %p55 = scmp.ne.s32.totalorder %s50, %s52
      %p56 = scmp.eq.s32.totalorder %s16, 0
      %p57 = por %p55, %p56
      %p58 = scmp.ne.s32.totalorder %s50, %s52
      %p59 = scmp.eq.s32.totalorder %s21, 1
      %p60 = por %p58, %p59
      %p61 = scmp.ne.s32.totalorder %s52, %s53
      %p62 = scmp.eq.s32.totalorder %s21, 0
      %p63 = por %p61, %p62
      %p64 = scmp.ne.s32.totalorder %s52, %s53
      %p65 = scmp.eq.s32.totalorder %s22, 1
      %p66 = por %p64, %p65
      %p68 = scmp.ne.s32.totalorder %s53, %s67
      %p69 = scmp.eq.s32.totalorder %s22, 0
      %p70 = por %p68, %p69
      %s72 = sadd.s32 %s71, 1
      %p75 = scmp.eq.s32.totalorder %s16, 1
      %p76 = scmp.ne.s32.totalorder %s71, %s73
      %p77 = scmp.eq.s32.totalorder %s16, 0
      %p78 = por %p76, %p77
      %p79 = scmp.ne.s32.totalorder %s71, %s73
      %p80 = scmp.eq.s32.totalorder %s21, 1
      %p81 = por %p79, %p80
      %p82 = scmp.ne.s32.totalorder %s73, %s74
      %p83 = scmp.eq.s32.totalorder %s21, 0
      %p84 = por %p82, %p83
      %p85 = scmp.ne.s32.totalorder %s73, %s74
      %p86 = scmp.eq.s32.totalorder %s22, 1
      %p87 = por %p85, %p86
      %p89 = scmp.ne.s32.totalorder %s74, %s88
      %p90 = scmp.eq.s32.totalorder %s22, 0
      %p91 = por %p89, %p90
      %s93 = sadd.s32 %s92, 1
      %p96 = scmp.eq.s32.totalorder %s16, 1
      %p97 = scmp.ne.s32.totalorder %s92, %s94
      %p98 = scmp.eq.s32.totalorder %s16, 0
      %p99 = por %p97, %p98
      %p100 = scmp.ne.s32.totalorder %s92, %s94
      %p101 = scmp.eq.s32.totalorder %s21, 1
      %p102 = por %p100, %p101
      %p103 = scmp.ne.s32.totalorder %s94, %s95
      %p104 = scmp.eq.s32.totalorder %s21, 0
      %p105 = por %p103, %p104
      %p106 = scmp.ne.s32.totalorder %s94, %s95
      %p107 = scmp.eq.s32.totalorder %s22, 1
      %p108 = por %p106, %p107
      %p110 = scmp.ne.s32.totalorder %s95, %s109
      %p111 = scmp.eq.s32.totalorder %s22, 0
      %p112 = por %p110, %p111
      %s114 = sadd.s32 %s113, 1
      %p117 = scmp.eq.s32.totalorder %s16, 1
      %p118 = scmp.ne.s32.totalorder %s113, %s115
      %p119 = scmp.eq.s32.totalorder %s16, 0
      %p120 = por %p118, %p119
      %p121 = scmp.ne.s32.totalorder %s113, %s115
      %p122 = scmp.eq.s32.totalorder %s21, 1
      %p123 = por %p121, %p122
      %p124 = scmp.ne.s32.totalorder %s115, %s116
      %p125 = scmp.eq.s32.totalorder %s21, 0
      %p126 = por %p124, %p125
      %p127 = scmp.ne.s32.totalorder %s115, %s116
      %p128 = scmp.eq.s32.totalorder %s22, 1
      %p129 = por %p127, %p128
      %p131 = scmp.ne.s32.totalorder %s116, %s130
      %p132 = scmp.eq.s32.totalorder %s22, 0
      %p133 = por %p131, %p132
      %s135 = sadd.s32 %s134, 1
      %p138 = scmp.eq.s32.totalorder %s16, 1
      %p139 = scmp.ne.s32.totalorder %s134, %s136
      %p140 = scmp.eq.s32.totalorder %s16, 0
      %p141 = por %p139, %p140
      %p142 = scmp.ne.s32.totalorder %s134, %s136
      %p143 = scmp.eq.s32.totalorder %s21, 1
      %p144 = por %p142, %p143
      %p145 = scmp.ne.s32.totalorder %s136, %s137
      %p146 = scmp.eq.s32.totalorder %s21, 0
      %p147 = por %p145, %p146
      %p148 = scmp.ne.s32.totalorder %s136, %s137
      %p149 = scmp.eq.s32.totalorder %s22, 1
      %p150 = por %p148, %p149
      %p152 = scmp.ne.s32.totalorder %s137, %s151
      %p153 = scmp.eq.s32.totalorder %s22, 0
      %p154 = por %p152, %p153
      %s156 = sadd.s32 %s155, 1
      %p159 = scmp.eq.s32.totalorder %s16, 1
      %p160 = scmp.ne.s32.totalorder %s155, %s157
      %p161 = scmp.eq.s32.totalorder %s16, 0
      %p162 = por %p160, %p161
      %p163 = scmp.ne.s32.totalorder %s155, %s157
      %p164 = scmp.eq.s32.totalorder %s21, 1
      %p165 = por %p163, %p164
      %p166 = scmp.ne.s32.totalorder %s157, %s158
      %p167 = scmp.eq.s32.totalorder %s21, 0
      %p168 = por %p166, %p167
      %p169 = scmp.ne.s32.totalorder %s157, %s158
      %p170 = scmp.eq.s32.totalorder %s22, 1
      %p171 = por %p169, %p170
      %p173 = scmp.ne.s32.totalorder %s158, %s172
      %p174 = scmp.eq.s32.totalorder %s22, 0
      %p175 = por %p173, %p174
      %s176 = ssub.s32 %s16, %s23
      %p177 = scmp.eq.s32.totalorder %s176, 0
      %s179 = sadd.s32 %s178, 1
      %s180 = scalar_select %p177, %s178, %s179
      %p183 = pneg %p177
      %p184 = scmp.eq.s32.totalorder %s16, 1
      %p185 = por %p183, %p184
      %p186 = scmp.ne.s32.totalorder %s178, %s181
      %p187 = scmp.eq.s32.totalorder %s16, 0
      %p188 = por %p186, %p187
      %p189 = scmp.ne.s32.totalorder %s178, %s181
      %p190 = scmp.eq.s32.totalorder %s21, 1
      %p191 = por %p189, %p190
      %p192 = scmp.ne.s32.totalorder %s181, %s182
      %p193 = scmp.eq.s32.totalorder %s21, 0
      %p194 = por %p192, %p193
      %p195 = scmp.ne.s32.totalorder %s181, %s182
      %p196 = scmp.eq.s32.totalorder %s22, 1
      %p197 = por %p195, %p196
      %p199 = scmp.ne.s32.totalorder %s182, %s198
      %p200 = scmp.eq.s32.totalorder %s22, 0
      %p201 = por %p199, %p200
      %p202 = scmp.le.s32.totalorder 1, %s16
      %p203 = scmp.lt.s32.totalorder %s16, 3
      %p204 = pnand %p202, %p203
      %p205 = pneg %p204
      // Predicated region
      $region9: #{tpu_custom_call.1} parent=5 // pred_check
        _
      $region10: #{tpu_custom_call.1} parent=5 // pred_check_branch
        %207 = sbr.rel (%p204) target = $region12
      $region11: #{tpu_custom_call.1} parent=5 // pred_region
        %s208 = ssub.s32 %s16, 1
        // Predicated region
        $region13: #{tpu_custom_call.1} parent=11 // pred_check
          %p209 = pneg %p63
        $region14: #{tpu_custom_call.1} parent=11 // pred_check_branch
          %211 = sbr.rel (%p209) target = $region16
        $region15: #{tpu_custom_call.1} parent=11 // pred_region
          _
        $region16: #{tpu_custom_call.1} parent=11 // pred_fallthru
          _
        // Predicated region
        $region17: #{tpu_custom_call.1} parent=11 // pred_check
          %p212 = pneg %p84
        $region18: #{tpu_custom_call.1} parent=11 // pred_check_branch
          %214 = sbr.rel (%p212) target = $region20
        $region19: #{tpu_custom_call.1} parent=11 // pred_region
          _
        $region20: #{tpu_custom_call.1} parent=11 // pred_fallthru
          _
        // Predicated region
        $region21: #{tpu_custom_call.1} parent=11 // pred_check
          %p215 = pneg %p105
        $region22: #{tpu_custom_call.1} parent=11 // pred_check_branch
          %217 = sbr.rel (%p215) target = $region24
        $region23: #{tpu_custom_call.1} parent=11 // pred_region
          _
        $region24: #{tpu_custom_call.1} parent=11 // pred_fallthru
          _
        // Predicated region
        $region25: #{tpu_custom_call.1} parent=11 // pred_check
          %p218 = pneg %p126
        $region26: #{tpu_custom_call.1} parent=11 // pred_check_branch
          %220 = sbr.rel (%p218) target = $region28
        $region27: #{tpu_custom_call.1} parent=11 // pred_region
          _
        $region28: #{tpu_custom_call.1} parent=11 // pred_fallthru
          _
        // Predicated region
        $region29: #{tpu_custom_call.1} parent=11 // pred_check
          %p221 = pneg %p147
        $region30: #{tpu_custom_call.1} parent=11 // pred_check_branch
          %223 = sbr.rel (%p221) target = $region32
        $region31: #{tpu_custom_call.1} parent=11 // pred_region
          _
        $region32: #{tpu_custom_call.1} parent=11 // pred_fallthru
          _
        // Predicated region
        $region33: #{tpu_custom_call.1} parent=11 // pred_check
          %p224 = pneg %p168
        $region34: #{tpu_custom_call.1} parent=11 // pred_check_branch
          %226 = sbr.rel (%p224) target = $region36
        $region35: #{tpu_custom_call.1} parent=11 // pred_region
          _
        $region36: #{tpu_custom_call.1} parent=11 // pred_fallthru
          _
      $region12: #{tpu_custom_call.1} parent=5 // pred_fallthru
        _
      %p227 = scmp.lt.s32.totalorder %s16, 2
      // Predicated region
      $region37: #{tpu_custom_call.1} parent=5 // pred_check
        %p228 = pneg %p227
      $region38: #{tpu_custom_call.1} parent=5 // pred_check_branch
        %230 = sbr.rel (%p228) target = $region40
      $region39: #{tpu_custom_call.1} parent=5 // pred_region
        // Predicated region
        $region41: #{tpu_custom_call.1} parent=39 // pred_check
          %p231 = pneg %p36
        $region42: #{tpu_custom_call.1} parent=39 // pred_check_branch
          %233 = sbr.rel (%p231) target = $region44
        $region43: #{tpu_custom_call.1} parent=39 // pred_region
          %s234 = sand.u32 %s26, 1
          %s235 = sand.u32 %s26, 1
          %s236 = smul.addr %s235, 16
          %s237 = scalar_lea.vmem [#allocation2], %s236
          %s238 = smul.addr %s16, 8
          %s239 = scalar_lea.vmem %s0, %s238
          // Predicated region
          $region45: #{tpu_custom_call.1} parent=43 // pred_check
            _
          $region46: #{tpu_custom_call.1} parent=43 // pred_check_branch
            %241 = sbr.rel (0) target = $region48
          $region47: #{tpu_custom_call.1} parent=43 // pred_region
            // Predicated region
            $region49: #{tpu_custom_call.1} parent=47 // pred_check
              _
            $region50: #{tpu_custom_call.1} parent=47 // pred_check_branch
              %243 = sbr.rel (0) target = $region52
            $region51: #{tpu_custom_call.1} parent=47 // pred_region
              // Predicated region
              $region64: #{tpu_custom_call.1} parent=51 // pred_check
                _
              $region65: #{tpu_custom_call.1} parent=51 // pred_check_branch
                %261 = sbr.rel (0) target = $region67
              $region66: #{tpu_custom_call.1} parent=51 // pred_region
                loop: start=0, step=1, limit=1
                $region68: #{tpu_custom_call.1} parent=66 // loop_pre_header
                  _
                $region69: #{tpu_custom_call.1} parent=66 // loop_header
                  %s263 = sphi 0, %s267
                  %p264 = scmp.ge.s32.totalorder %s263, 1
                  %s268 = sphi %s239, %s239
                  %s269 = sphi %s237, %s237
                $region70: #{tpu_custom_call.1} parent=66 // loop_header_branch
                  %266 = sbr.rel (%p264) target = $region74
                $region71: #{tpu_custom_call.1} parent=66 // loop_body
                  %v270 = vld [vmem:[%s268] sm:$0xff]
                  %271 = vst [vmem:[%s269] sm:$0xff] %v270
                  %v272 = vld [vmem:[%s268 + $0x10] sm:$0xff]
                  %273 = vst [vmem:[%s269 + $0x8] sm:$0xff] %v272
                $region72: #{tpu_custom_call.1} parent=66 // loop_footer
                  %s267 = sadd.s32 1, %s263
                $region73: #{tpu_custom_call.1} parent=66 // loop_footer_branch
                  %262 = sbr.rel target = $region69
                $region74: #{tpu_custom_call.1} parent=66 // loop_exit
                  _
              $region67: #{tpu_custom_call.1} parent=51 // pred_fallthru
                _
              // Predicated region
              $region75: #{tpu_custom_call.1} parent=51 // pred_check
                _
              $region76: #{tpu_custom_call.1} parent=51 // pred_check_branch
                %275 = sbr.rel target = $region78
              $region77: #{tpu_custom_call.1} parent=51 // pred_region
                _
              $region78: #{tpu_custom_call.1} parent=51 // pred_fallthru
                _
            $region52: #{tpu_custom_call.1} parent=47 // pred_fallthru
              _
            // Predicated region
            $region53: #{tpu_custom_call.1} parent=47 // pred_check
              _
            $region54: #{tpu_custom_call.1} parent=47 // pred_check_branch
              %245 = sbr.rel target = $region56
            $region55: #{tpu_custom_call.1} parent=47 // pred_region
              %s247 = ssub.s32 256, 1
              loop: start=0, step=1, limit=1
              $region57: #{tpu_custom_call.1} parent=55 // loop_pre_header
                _
              $region58: #{tpu_custom_call.1} parent=55 // loop_header
                %s249 = sphi 0, %s253
                %p250 = scmp.ge.s32.totalorder %s249, 1
                %s254 = sphi %s239, %s239
                %s255 = sphi %s237, %s237
              $region59: #{tpu_custom_call.1} parent=55 // loop_header_branch
                %252 = sbr.rel (%p250) target = $region63
              $region60: #{tpu_custom_call.1} parent=55 // loop_body
                %v256 = vld [vmem:[%s254] sm:%s247]
                %257 = vst [vmem:[%s255] sm:%s247] %v256
                %v258 = vld [vmem:[%s254 + $0x10] sm:%s247]
                %259 = vst [vmem:[%s255 + $0x8] sm:%s247] %v258
              $region61: #{tpu_custom_call.1} parent=55 // loop_footer
                %s253 = sadd.s32 1, %s249
              $region62: #{tpu_custom_call.1} parent=55 // loop_footer_branch
                %248 = sbr.rel target = $region58
              $region63: #{tpu_custom_call.1} parent=55 // loop_exit
                _
            $region56: #{tpu_custom_call.1} parent=47 // pred_fallthru
              _
          $region48: #{tpu_custom_call.1} parent=43 // pred_fallthru
            _
          %276 = vnop
        $region44: #{tpu_custom_call.1} parent=39 // pred_fallthru
          _
      $region40: #{tpu_custom_call.1} parent=5 // pred_fallthru
        _
      %p277 = scmp.le.s32.totalorder 1, %s16
      %p278 = scmp.lt.s32.totalorder %s16, 3
      %p279 = pnand %p277, %p278
      %p280 = pneg %p279
      // Predicated region
      $region79: #{tpu_custom_call.1} parent=5 // pred_check
        _
      $region80: #{tpu_custom_call.1} parent=5 // pred_check_branch
        %282 = sbr.rel (%p279) target = $region82
      $region81: #{tpu_custom_call.1} parent=5 // pred_region
        %s283 = ssub.s32 %s16, 1
        %s284 = sand.u32 %s29, 1
        %s285 = sand.u32 %s29, 1
        %s286 = smul.addr %s285, 16
        %s287 = scalar_lea.vmem [#allocation2], %s286
        // Predicated region
        $region83: #{tpu_custom_call.1} parent=81 // pred_check
          %p288 = pneg %p42
        $region84: #{tpu_custom_call.1} parent=81 // pred_check_branch
          %290 = sbr.rel (%p288) target = $region86
        $region85: #{tpu_custom_call.1} parent=81 // pred_region
          _
        $region86: #{tpu_custom_call.1} parent=81 // pred_fallthru
          _
        %s291 = sand.u32 %s29, 1
        %s292 = sand.u32 %s29, 1
        %s293 = smul.addr %s292, 16
        %s294 = scalar_lea.vmem [#allocation2], %s293
        %p295 = pneg %p42
        %p296 = pneg %p39
        %p297 = pneg %p63
        %p298 = pneg %p60
        %p299 = pneg %p84
        %p300 = pneg %p81
        %p301 = pneg %p105
        %p302 = pneg %p102
        %p303 = pneg %p126
        %p304 = pneg %p123
        %p305 = pneg %p147
        %p306 = pneg %p144
        %p307 = pneg %p168
        %p308 = pneg %p165
        %p309 = pneg %p194
        %p310 = pneg %p191
        %s311 = sand.u32 %s181, 1
        %s312 = scalar_lea.sflag [#allocation4], %s311
        %s313 = sand.u32 %s181, 1
        %s314 = smul.addr %s313, 8
        %s315 = scalar_lea.vmem [#allocation3], %s314
        %v316 = vld [vmem:[%s287] sm:$0xff]
        %v317 = vld [vmem:[%s287 + $0x8] sm:$0xff]
        %v318 = vld [vmem:[%s1] sm:$0xff]
        %v319 = vld [vmem:[%s1 + $0x8] sm:$0xff]
        %v320 = vld [vmem:[%s1 + $0x10] sm:$0xff]
        %v321 = vld [vmem:[%s1 + $0x18] sm:$0xff]
        %v322 = vld [vmem:[%s2] sm:$0xff]
        %v323 = vld [vmem:[%s2 + $0x8] sm:$0xff]
        %v324 = vld [vmem:[%s2 + $0x10] sm:$0xff]
        %v325 = vld [vmem:[%s2 + $0x18] sm:$0xff]
        %327 = vset.pattern.permute.xlu0 0
        %328 = vperm.xlu0 %327, %v322
        %v329 = vpop.permute.xlu0 %328
        %332 = vset.pattern.permute.xlu0 0
        %333 = vperm.xlu0 %332, %v323
        %v334 = vpop.permute.xlu0 %333
        %337 = vset.pattern.permute.xlu0 0
        %338 = vperm.xlu0 %337, %v324
        %v339 = vpop.permute.xlu0 %338
        %342 = vset.pattern.permute.xlu0 0
        %343 = vperm.xlu0 %342, %v325
        %v344 = vpop.permute.xlu0 %343
        %vm346 = vcmask 130048
        %v348 = vsel %vm346, %v318, 0
        %v351 = vsel %vm346, %v319, 0
        %v354 = vsel %vm346, %v320, 0
        %v357 = vsel %vm346, %v321, 0
        %359 = vmatprep.subr.mxu0 0.0
        %360 = vmatpush1.msra.mxu0 0.0
        %361 = vmatprep.subr.mxu0 0.0
        %362 = vmatpush1.msra.mxu0 0.0
        %363 = vmatprep.subr.mxu0 0.0
        %364 = vmatpush1.msra.mxu0 0.0
        %365 = vmatprep.subr.mxu0 0.0
        %366 = vmatpush1.msra.mxu0 0.0
        %367 = vmatprep.subr.mxu0 0.0
        %368 = vmatpush1.msra.mxu0 0.0
        %369 = vmatprep.subr.mxu0 0.0
        %370 = vmatpush1.msra.mxu0 0.0
        %371 = vmatprep.subr.mxu0 0.0
        %372 = vmatpush1.msra.mxu0 0.0
        %373 = vmatprep.subr.mxu0 0.0
        %374 = vmatpush1.msra.mxu0 0.0
        %375 = vmatprep.subr.mxu0 0.0
        %376 = vmatpush1.msra.mxu0 0.0
        %377 = vmatprep.subr.mxu0 0.0
        %378 = vmatpush1.msra.mxu0 0.0
        %379 = vmatprep.subr.mxu0 0.0
        %380 = vmatpush1.msra.mxu0 0.0
        %381 = vmatprep.subr.mxu0 0.0
        %382 = vmatpush1.msra.mxu0 0.0
        %383 = vmatprep.subr.mxu0 0.0
        %384 = vmatpush1.msra.mxu0 0.0
        %385 = vmatprep.subr.mxu0 0.0
        %386 = vmatpush1.msra.mxu0 0.0
        %387 = vmatprep.subr.mxu0 0.0
        %388 = vmatpush1.msra.mxu0 %v317
        %389 = vmatprep.subr.mxu0 0.0
        %390 = vmatpush1.msra.mxu0 %v316
        %391 = vmatprep.subr.mxu0 0.0
        %392 = vmatpush2.msra.mxu0 0.0
        %393 = vmatprep.subr.mxu0 0.0
        %394 = vmatpush2.msra.mxu0 0.0
        %395 = vmatprep.subr.mxu0 0.0
        %396 = vmatpush2.msra.mxu0 0.0
        %397 = vmatprep.subr.mxu0 0.0
        %398 = vmatpush2.msra.mxu0 0.0
        %399 = vmatprep.subr.mxu0 0.0
        %400 = vmatpush2.msra.mxu0 0.0
        %401 = vmatprep.subr.mxu0 0.0
        %402 = vmatpush2.msra.mxu0 0.0
        %403 = vmatprep.subr.mxu0 0.0
        %404 = vmatpush2.msra.mxu0 0.0
        %405 = vmatprep.subr.mxu0 0.0
        %406 = vmatpush2.msra.mxu0 0.0
        %407 = vmatprep.subr.mxu0 0.0
        %408 = vmatpush2.msra.mxu0 0.0
        %409 = vmatprep.subr.mxu0 0.0
        %410 = vmatpush2.msra.mxu0 0.0
        %411 = vmatprep.subr.mxu0 0.0
        %412 = vmatpush2.msra.mxu0 0.0
        %413 = vmatprep.subr.mxu0 0.0
        %414 = vmatpush2.msra.mxu0 0.0
        %415 = vmatprep.subr.mxu0 0.0
        %416 = vmatpush2.msra.mxu0 0.0
        %417 = vmatprep.subr.mxu0 0.0
        %418 = vmatpush2.msra.mxu0 0.0
        %419 = vmatprep.subr.mxu0 0.0
        %420 = vmatpush2.msra.mxu0 0.0
        %421 = vmatprep.subr.mxu0 0.0
        %422 = vmatpush2.msra.mxu0 0.0
        %423 = vmatprep.mubr.f32.mxu0 0.0
        %424 = vmatmul.mubr.f32.gmra.mxu0 %v348
        %v425 = vpop.f32.mrf.mxu0
        %v426 = vadd.f32 %v329, %v425
        %v427 = vpop.f32.mrf.mxu0
        %428 = vmatprep.mubr.f32.mxu0 0.0
        %429 = vmatmul.mubr.f32.gmra.mxu0 %v351
        %v430 = vpop.f32.mrf.mxu0
        %v431 = vadd.f32 %v334, %v430
        %v432 = vpop.f32.mrf.mxu0
        %433 = vmatprep.mubr.f32.mxu0 0.0
        %434 = vmatmul.mubr.f32.gmra.mxu0 %v354
        %v435 = vpop.f32.mrf.mxu0
        %v436 = vadd.f32 %v339, %v435
        %v437 = vpop.f32.mrf.mxu0
        %438 = vmatprep.mubr.f32.mxu0 0.0
        %439 = vmatmul.mubr.f32.gmra.mxu0 %v357
        %v440 = vpop.f32.mrf.mxu0
        %v441 = vadd.f32 %v344, %v440
        %v442 = vpop.f32.mrf.mxu0
        %443 = vdwg.mxu0
        %v444 = vmax.f32 %v426, 0.0
        %v445 = vmax.f32 %v431, 0.0
        %v446 = vmax.f32 %v436, 0.0
        %v447 = vmax.f32 %v441, 0.0
        %v448 = vld [vmem:[%s3] sm:$0xff]
        %v449 = vld [vmem:[%s3 + $0x8] sm:$0xff]
        %v450 = vld [vmem:[%s3 + $0x10] sm:$0xff]
        %v451 = vld [vmem:[%s3 + $0x18] sm:$0xff]
        %v452 = vld [vmem:[%s4] sm:$0xff]
        %v453 = vld [vmem:[%s4 + $0x8] sm:$0xff]
        %v454 = vld [vmem:[%s4 + $0x10] sm:$0xff]
        %v455 = vld [vmem:[%s4 + $0x18] sm:$0xff]
        %457 = vset.pattern.permute.xlu0 0
        %458 = vperm.xlu0 %457, %v452
        %v459 = vpop.permute.xlu0 %458
        %462 = vset.pattern.permute.xlu0 0
        %463 = vperm.xlu0 %462, %v453
        %v464 = vpop.permute.xlu0 %463
        %467 = vset.pattern.permute.xlu0 0
        %468 = vperm.xlu0 %467, %v454
        %v469 = vpop.permute.xlu0 %468
        %472 = vset.pattern.permute.xlu0 0
        %473 = vperm.xlu0 %472, %v455
        %v474 = vpop.permute.xlu0 %473
        %vm476 = vcmask 261120
        %v478 = vsel %vm476, %v448, 0
        %v481 = vsel %vm476, %v449, 0
        %v484 = vsel %vm476, %v450, 0
        %v487 = vsel %vm476, %v451, 0
        %489 = vmatprep.subr.mxu0 0.0
        %490 = vmatpush1.msra.mxu0 0.0
        %491 = vmatprep.subr.mxu0 0.0
        %492 = vmatpush1.msra.mxu0 0.0
        %493 = vmatprep.subr.mxu0 0.0
        %494 = vmatpush1.msra.mxu0 0.0
        %495 = vmatprep.subr.mxu0 0.0
        %496 = vmatpush1.msra.mxu0 0.0
        %497 = vmatprep.subr.mxu0 0.0
        %498 = vmatpush1.msra.mxu0 0.0
        %499 = vmatprep.subr.mxu0 0.0
        %500 = vmatpush1.msra.mxu0 0.0
        %501 = vmatprep.subr.mxu0 0.0
        %502 = vmatpush1.msra.mxu0 0.0
        %503 = vmatprep.subr.mxu0 0.0
        %504 = vmatpush1.msra.mxu0 0.0
        %505 = vmatprep.subr.mxu0 0.0
        %506 = vmatpush1.msra.mxu0 0.0
        %507 = vmatprep.subr.mxu0 0.0
        %508 = vmatpush1.msra.mxu0 0.0
        %509 = vmatprep.subr.mxu0 0.0
        %510 = vmatpush1.msra.mxu0 0.0
        %511 = vmatprep.subr.mxu0 0.0
        %512 = vmatpush1.msra.mxu0 0.0
        %513 = vmatprep.subr.mxu0 0.0
        %514 = vmatpush1.msra.mxu0 %v447
        %515 = vmatprep.subr.mxu0 0.0
        %516 = vmatpush1.msra.mxu0 %v446
        %517 = vmatprep.subr.mxu0 0.0
        %518 = vmatpush1.msra.mxu0 %v445
        %519 = vmatprep.subr.mxu0 0.0
        %520 = vmatpush1.msra.mxu0 %v444
        %521 = vmatprep.subr.mxu0 0.0
        %522 = vmatpush2.msra.mxu0 0.0
        %523 = vmatprep.subr.mxu0 0.0
        %524 = vmatpush2.msra.mxu0 0.0
        %525 = vmatprep.subr.mxu0 0.0
        %526 = vmatpush2.msra.mxu0 0.0
        %527 = vmatprep.subr.mxu0 0.0
        %528 = vmatpush2.msra.mxu0 0.0
        %529 = vmatprep.subr.mxu0 0.0
        %530 = vmatpush2.msra.mxu0 0.0
        %531 = vmatprep.subr.mxu0 0.0
        %532 = vmatpush2.msra.mxu0 0.0
        %533 = vmatprep.subr.mxu0 0.0
        %534 = vmatpush2.msra.mxu0 0.0
        %535 = vmatprep.subr.mxu0 0.0
        %536 = vmatpush2.msra.mxu0 0.0
        %537 = vmatprep.subr.mxu0 0.0
        %538 = vmatpush2.msra.mxu0 0.0
        %539 = vmatprep.subr.mxu0 0.0
        %540 = vmatpush2.msra.mxu0 0.0
        %541 = vmatprep.subr.mxu0 0.0
        %542 = vmatpush2.msra.mxu0 0.0
        %543 = vmatprep.subr.mxu0 0.0
        %544 = vmatpush2.msra.mxu0 0.0
        %545 = vmatprep.subr.mxu0 0.0
        %546 = vmatpush2.msra.mxu0 0.0
        %547 = vmatprep.subr.mxu0 0.0
        %548 = vmatpush2.msra.mxu0 0.0
        %549 = vmatprep.subr.mxu0 0.0
        %550 = vmatpush2.msra.mxu0 0.0
        %551 = vmatprep.subr.mxu0 0.0
        %552 = vmatpush2.msra.mxu0 0.0
        %553 = vmatprep.mubr.f32.mxu0 0.0
        %554 = vmatmul.mubr.f32.gmra.mxu0 %v478
        %v555 = vpop.f32.mrf.mxu0
        %v556 = vadd.f32 %v459, %v555
        %v557 = vpop.f32.mrf.mxu0
        %558 = vmatprep.mubr.f32.mxu0 0.0
        %559 = vmatmul.mubr.f32.gmra.mxu0 %v481
        %v560 = vpop.f32.mrf.mxu0
        %v561 = vadd.f32 %v464, %v560
        %v562 = vpop.f32.mrf.mxu0
        %563 = vmatprep.mubr.f32.mxu0 0.0
        %564 = vmatmul.mubr.f32.gmra.mxu0 %v484
        %v565 = vpop.f32.mrf.mxu0
        %v566 = vadd.f32 %v469, %v565
        %v567 = vpop.f32.mrf.mxu0
        %568 = vmatprep.mubr.f32.mxu0 0.0
        %569 = vmatmul.mubr.f32.gmra.mxu0 %v487
        %v570 = vpop.f32.mrf.mxu0
        %v571 = vadd.f32 %v474, %v570
        %v572 = vpop.f32.mrf.mxu0
        %573 = vdwg.mxu0
        %v574 = vmax.f32 %v556, 0.0
        %v575 = vmax.f32 %v561, 0.0
        %v576 = vmax.f32 %v566, 0.0
        %v577 = vmax.f32 %v571, 0.0
        %v578 = vld [vmem:[%s5] sm:$0xff]
        %v579 = vld [vmem:[%s6] sm:$0xff]
        %581 = vset.pattern.permute.xlu0 0
        %582 = vperm.xlu0 %581, %v579
        %v583 = vpop.permute.xlu0 %582
        %v586 = vsel %vm476, %v578, 0
        %588 = vmatprep.subr.mxu0 0.0
        %589 = vmatpush1.msra.mxu0 0.0
        %590 = vmatprep.subr.mxu0 0.0
        %591 = vmatpush1.msra.mxu0 0.0
        %592 = vmatprep.subr.mxu0 0.0
        %593 = vmatpush1.msra.mxu0 0.0
        %594 = vmatprep.subr.mxu0 0.0
        %595 = vmatpush1.msra.mxu0 0.0
        %596 = vmatprep.subr.mxu0 0.0
        %597 = vmatpush1.msra.mxu0 0.0
        %598 = vmatprep.subr.mxu0 0.0
        %599 = vmatpush1.msra.mxu0 0.0
        %600 = vmatprep.subr.mxu0 0.0
        %601 = vmatpush1.msra.mxu0 0.0
        %602 = vmatprep.subr.mxu0 0.0
        %603 = vmatpush1.msra.mxu0 0.0
        %604 = vmatprep.subr.mxu0 0.0
        %605 = vmatpush1.msra.mxu0 0.0
        %606 = vmatprep.subr.mxu0 0.0
        %607 = vmatpush1.msra.mxu0 0.0
        %608 = vmatprep.subr.mxu0 0.0
        %609 = vmatpush1.msra.mxu0 0.0
        %610 = vmatprep.subr.mxu0 0.0
        %611 = vmatpush1.msra.mxu0 0.0
        %612 = vmatprep.subr.mxu0 0.0
        %613 = vmatpush1.msra.mxu0 %v577
        %614 = vmatprep.subr.mxu0 0.0
        %615 = vmatpush1.msra.mxu0 %v576
        %616 = vmatprep.subr.mxu0 0.0
        %617 = vmatpush1.msra.mxu0 %v575
        %618 = vmatprep.subr.mxu0 0.0
        %619 = vmatpush1.msra.mxu0 %v574
        %620 = vmatprep.subr.mxu0 0.0
        %621 = vmatpush2.msra.mxu0 0.0
        %622 = vmatprep.subr.mxu0 0.0
        %623 = vmatpush2.msra.mxu0 0.0
        %624 = vmatprep.subr.mxu0 0.0
        %625 = vmatpush2.msra.mxu0 0.0
        %626 = vmatprep.subr.mxu0 0.0
        %627 = vmatpush2.msra.mxu0 0.0
        %628 = vmatprep.subr.mxu0 0.0
        %629 = vmatpush2.msra.mxu0 0.0
        %630 = vmatprep.subr.mxu0 0.0
        %631 = vmatpush2.msra.mxu0 0.0
        %632 = vmatprep.subr.mxu0 0.0
        %633 = vmatpush2.msra.mxu0 0.0
        %634 = vmatprep.subr.mxu0 0.0
        %635 = vmatpush2.msra.mxu0 0.0
        %636 = vmatprep.subr.mxu0 0.0
        %637 = vmatpush2.msra.mxu0 0.0
        %638 = vmatprep.subr.mxu0 0.0
        %639 = vmatpush2.msra.mxu0 0.0
        %640 = vmatprep.subr.mxu0 0.0
        %641 = vmatpush2.msra.mxu0 0.0
        %642 = vmatprep.subr.mxu0 0.0
        %643 = vmatpush2.msra.mxu0 0.0
        %644 = vmatprep.subr.mxu0 0.0
        %645 = vmatpush2.msra.mxu0 0.0
        %646 = vmatprep.subr.mxu0 0.0
        %647 = vmatpush2.msra.mxu0 0.0
        %648 = vmatprep.subr.mxu0 0.0
        %649 = vmatpush2.msra.mxu0 0.0
        %650 = vmatprep.subr.mxu0 0.0
        %651 = vmatpush2.msra.mxu0 0.0
        %652 = vmatprep.mubr.f32.mxu0 0.0
        %653 = vmatmul.mubr.f32.gmra.mxu0 %v586
        %v654 = vpop.f32.mrf.mxu0
        %v655 = vadd.f32 %v583, %v654
        %v656 = vpop.f32.mrf.mxu0
        %657 = vdwg.mxu0
        %v658 = vtanh.pop %v655
        %v659 = vmul.f32 %v658, 2.0
        %660 = vst [vmem:[%s315] sm:$0xff] %v659
        %s661 = sand.u32 %s181, 1
        %s662 = scalar_lea.sflag [#allocation4], %s661
        %s663 = sand.u32 %s181, 1
        %s664 = smul.addr %s663, 8
        %s665 = scalar_lea.vmem [#allocation3], %s664
        // Predicated region
        $region87: #{tpu_custom_call.1} parent=81 // pred_check
          %p666 = pneg %p191
        $region88: #{tpu_custom_call.1} parent=81 // pred_check_branch
          %668 = sbr.rel (%p666) target = $region90
        $region89: #{tpu_custom_call.1} parent=81 // pred_region
          %s670 = ssub.s32 128, 128
          %671 = vsyncadd %s662, %s670
          %s672 = smul.addr %s21, 128
          %s673 = scalar_lea.hbm %s7, %s672
          %s675 = sshll.u32 %s665, 4
          %s676 = int_to_ptr.vmem [resolvable:$true] %s675
          %678 = dma.vmem_to_hbm [thread:$0]  %s676, 128, %s673, %s662
        $region90: #{tpu_custom_call.1} parent=81 // pred_fallthru
          _
      $region82: #{tpu_custom_call.1} parent=5 // pred_fallthru
        _
      %p679 = scmp.le.s32.totalorder 2, %s16
      // Predicated region
      $region91: #{tpu_custom_call.1} parent=5 // pred_check
        %p680 = pneg %p679
      $region92: #{tpu_custom_call.1} parent=5 // pred_check_branch
        %682 = sbr.rel (%p680) target = $region94
      $region93: #{tpu_custom_call.1} parent=5 // pred_region
        %s683 = ssub.s32 %s16, 2
        // Predicated region
        $region95: #{tpu_custom_call.1} parent=93 // pred_check
          %p684 = pneg %p197
        $region96: #{tpu_custom_call.1} parent=93 // pred_check_branch
          %686 = sbr.rel (%p684) target = $region98
        $region97: #{tpu_custom_call.1} parent=93 // pred_region
          %s687 = sand.u32 %s182, 1
          %s688 = scalar_lea.sflag [#allocation4], %s687
          %s689 = sand.u32 %s182, 1
          %s690 = smul.addr %s689, 8
          %s691 = scalar_lea.vmem [#allocation3], %s690
          %692 = dma.done %s688, 128
        $region98: #{tpu_custom_call.1} parent=93 // pred_fallthru
          _
      $region94: #{tpu_custom_call.1} parent=5 // pred_fallthru
        _
    $region6: #{tpu_custom_call.1} parent=1 // loop_footer
      %s20 = sadd.s32 1, %s16
    $region7: #{tpu_custom_call.1} parent=1 // loop_footer_branch
      %15 = sbr.rel target = $region3
    $region8: #{tpu_custom_call.1} parent=1 // loop_exit
      _
    %693 = vsyncpa [#allocation4], 1
    %s694 = scalar_lea.sflag [#allocation4], 1
    %695 = vsyncpa %s694, 1

</llo_original>
